<compile_context>
chip_gen: v6e
topology: v6e:2x2x1
jax: 0.10.0
libtpu: 0.0.40
codegen_flags: <defaults>
</compile_context>

<pallas_src>
import jax
import jax.numpy as jnp
from jax.experimental import pallas as pl
from jax.experimental.pallas import tpu as pltpu


def _pgn_kernel(x_ref, w1_ref, b1_ref, w2_ref, b2_ref, o_ref):
    x = x_ref[...].astype(jnp.float32)                       # (tb, In) f32
    in_dim = x.shape[1]
    # Layer 1: `in_dim` unrolled broadcast-FMAs on the VPU (K is tiny; the MXU
    # fill/drain is not worth it), f32 accumulation, bias, ReLU.
    h = jnp.broadcast_to(b1_ref[...], (x.shape[0], b1_ref.shape[1]))  # (tb, H)
    for k in range(in_dim):                                   # static unroll (In == 4)
        h = h + x[:, k:k + 1] * w1_ref[k:k + 1, :]
    h = jnp.maximum(h, 0.0)
    # Layer 2: (tb, H) @ (H, A) on the MXU, bf16 operands, f32 accumulation.
    logits = jnp.dot(h.astype(w2_ref.dtype), w2_ref[...],
                     preferred_element_type=jnp.float32)
    o_ref[...] = (logits + b2_ref[...]).astype(o_ref.dtype)


def _round_up(n, m):
    return ((n + m - 1) // m) * m


def _choose_batch_tile(B, block_b):
    """Few, large grid steps; even step count (>= 2) when the batch is large
    enough so v7x's two TensorCores both get work. tb is a multiple of 8."""
    if B <= block_b:
        if B > 2048:
            return _round_up(pl.cdiv(B, 2), 8)   # two balanced tiles (megacore)
        return _round_up(B, 8)                   # single step
    steps = pl.cdiv(B, block_b)
    if steps % 2:
        steps += 1                               # balanced even split for megacore
    return _round_up(pl.cdiv(B, steps), 8)


def pgn_forward(x, w1, b1, w2, b2, *, block_b=8192):
    """x: (B, In) f32; w1: (In, H); b1: (H,); w2: (H, A); b2: (A,) -> (B, A) f32."""
    B, in_dim = x.shape
    H = w1.shape[1]
    A = w2.shape[1]

    tb = _choose_batch_tile(B, block_b)
    grid = (pl.cdiv(B, tb),)                     # ragged last tile masked by Pallas

    w1_f32 = w1.astype(jnp.float32)
    b1_2d = b1.reshape(1, H).astype(jnp.float32)
    w2_bf16 = w2.astype(jnp.bfloat16)            # tiny param-side cast for the MXU
    b2_2d = b2.reshape(1, A).astype(jnp.float32)

    flops = 2 * B * (in_dim * H + H * A)
    bytes_accessed = (B * (in_dim + A) * 4
                      + (in_dim * H + H + A) * 4 + H * A * 2)

    return pl.pallas_call(
        _pgn_kernel,
        out_shape=jax.ShapeDtypeStruct((B, A), jnp.float32),
        grid_spec=pltpu.PrefetchScalarGridSpec(
            num_scalar_prefetch=0,
            grid=grid,
            in_specs=[
                pl.BlockSpec((tb, in_dim), lambda i: (i, 0)),   # x: tiled over batch
                pl.BlockSpec((in_dim, H), lambda i: (0, 0)),    # w1: resident
                pl.BlockSpec((1, H), lambda i: (0, 0)),         # b1: resident
                pl.BlockSpec((H, A), lambda i: (0, 0)),         # w2: resident
                pl.BlockSpec((1, A), lambda i: (0, 0)),         # b2: resident
            ],
            out_specs=pl.BlockSpec((tb, A), lambda i: (i, 0)),
        ),
        compiler_params=pltpu.CompilerParams(
            dimension_semantics=("parallel",),         # shard batch grid across TCs
            vmem_limit_bytes=48 * 1024 * 1024),        # ~8k-row lane-padded tiles fit
        cost_estimate=pl.CostEstimate(
            flops=flops, transcendentals=0, bytes_accessed=bytes_accessed),
    )(x, w1_f32, b1_2d, w2_bf16, b2_2d)


def _pgn_reference(x, w1, b1, w2, b2):
    """Layer 1 in full f32 (matches the kernel's VPU FMAs); layer 2 with the same
    bf16-operand / f32-accumulate recipe as the kernel's MXU matmul."""
    h = jnp.maximum(
        jnp.dot(x.astype(jnp.float32), w1.astype(jnp.float32),
                precision=jax.lax.Precision.HIGHEST,
                preferred_element_type=jnp.float32) + b1, 0.0)
    return jnp.dot(h.astype(jnp.bfloat16), w2.astype(jnp.bfloat16),
                   preferred_element_type=jnp.float32) + b2


def init_pgn_params(key, input_size, n_actions, hidden=128):
    """Deterministic init mimicking torch.nn.Linear default (U(-1/sqrt(fan_in), +))."""
    k1, k2, k3, k4 = jax.random.split(key, 4)
    bound1 = 1.0 / jnp.sqrt(jnp.float32(input_size))
    bound2 = 1.0 / jnp.sqrt(jnp.float32(hidden))
    w1 = jax.random.uniform(k1, (input_size, hidden), jnp.float32, -bound1, bound1)
    b1 = jax.random.uniform(k2, (hidden,), jnp.float32, -bound1, bound1)
    w2 = jax.random.uniform(k3, (hidden, n_actions), jnp.float32, -bound2, bound2)
    b2 = jax.random.uniform(k4, (n_actions,), jnp.float32, -bound2, bound2)
    return w1, b1, w2, b2


if __name__ == "__main__":
    # CartPole-like sizes: observation dim 4, 2 actions.
    input_size, n_actions = 4, 2

    key = jax.random.PRNGKey(0)
    kx1, kx2, kp = jax.random.split(key, 3)
    w1, b1, w2, b2 = init_pgn_params(kp, input_size, n_actions)

    # Tiny ragged batch: one partial 16-row tile (in-kernel masked tail, no pad/slice).
    x_small = jax.random.normal(kx1, (10, input_size), jnp.float32)
    out_small = jax.block_until_ready(pgn_forward(x_small, w1, b1, w2, b2))

    # Larger batch: small block_b forces a 4-step grid with a ragged last tile;
    # weights stay resident in VMEM across all steps.
    x_big = jax.random.normal(kx2, (300, input_size), jnp.float32)
    out_big = jax.block_until_ready(
        pgn_forward(x_big, w1, b1, w2, b2, block_b=128))

    ref_small = _pgn_reference(x_small, w1, b1, w2, b2)
    ref_big = _pgn_reference(x_big, w1, b1, w2, b2)

    assert out_small.shape == (10, n_actions)
    assert out_big.shape == (300, n_actions)
    assert jnp.allclose(out_small, ref_small, atol=1e-3, rtol=1e-3)
    assert jnp.allclose(out_big, ref_big, atol=1e-3, rtol=1e-3)

    print("KERNEL_OK")
</pallas_src>

<mosaic_0001>
module attributes {stable_mosaic.version = 11 : i64} {
  func.func @_pgn_kernel(%arg0: i32, %arg1: memref<16x4xf32, #tpu.memory_space<vmem>>, %arg2: memref<4x128xf32, #tpu.memory_space<vmem>>, %arg3: memref<1x128xf32, #tpu.memory_space<vmem>>, %arg4: memref<128x2xbf16, #tpu.memory_space<vmem>>, %arg5: memref<1x2xf32, #tpu.memory_space<vmem>>, %arg6: memref<16x2xf32, #tpu.memory_space<vmem>>) attributes {dimension_semantics = [#tpu.dimension_semantics<parallel>], iteration_bounds = array<i64: 1>, scalar_prefetch = 0 : i64, scratch_operands = 0 : i64, tpu.core_type = #tpu.core_type<tc>, window_params = [{transform_indices = @transform_0, window_bounds = array<i64: 16, 4>}, {pipeline_mode = #tpu.pipeline_mode<synchronous>, transform_indices = @transform_1, window_bounds = array<i64: 4, 128>}, {pipeline_mode = #tpu.pipeline_mode<synchronous>, transform_indices = @transform_2, window_bounds = array<i64: 1, 128>}, {pipeline_mode = #tpu.pipeline_mode<synchronous>, transform_indices = @transform_3, window_bounds = array<i64: 128, 2>}, {pipeline_mode = #tpu.pipeline_mode<synchronous>, transform_indices = @transform_4, window_bounds = array<i64: 1, 2>}, {transform_indices = @transform_5, window_bounds = array<i64: 16, 2>}]} {
    %c0 = arith.constant 0 : index
    %c0_0 = arith.constant 0 : index
    %0 = vector.load %arg1[%c0, %c0_0] : memref<16x4xf32, #tpu.memory_space<vmem>>, vector<16x4xf32>
    %c0_1 = arith.constant 0 : index
    %c0_2 = arith.constant 0 : index
    %1 = vector.load %arg3[%c0_1, %c0_2] : memref<1x128xf32, #tpu.memory_space<vmem>>, vector<1x128xf32>
    %2 = vector.shape_cast %1 : vector<1x128xf32> to vector<1x128xf32>
    %3 = vector.broadcast %2 : vector<1x128xf32> to vector<16x128xf32>
    %4 = vector.extract_strided_slice %0 {offsets = [0, 0], sizes = [16, 1], strides = [1, 1]} : vector<16x4xf32> to vector<16x1xf32>
    %c0_3 = arith.constant 0 : index
    %c0_4 = arith.constant 0 : index
    %5 = vector.load %arg2[%c0_3, %c0_4] : memref<4x128xf32, #tpu.memory_space<vmem>>, vector<1x128xf32>
    %6 = vector.broadcast %4 : vector<16x1xf32> to vector<16x128xf32>
    %7 = vector.broadcast %5 : vector<1x128xf32> to vector<16x128xf32>
    %8 = arith.mulf %6, %7 : vector<16x128xf32>
    %9 = arith.addf %3, %8 : vector<16x128xf32>
    %10 = vector.extract_strided_slice %0 {offsets = [0, 1], sizes = [16, 1], strides = [1, 1]} : vector<16x4xf32> to vector<16x1xf32>
    %c1 = arith.constant 1 : index
    %c0_5 = arith.constant 0 : index
    %11 = vector.load %arg2[%c1, %c0_5] : memref<4x128xf32, #tpu.memory_space<vmem>>, vector<1x128xf32>
    %12 = vector.broadcast %10 : vector<16x1xf32> to vector<16x128xf32>
    %13 = vector.broadcast %11 : vector<1x128xf32> to vector<16x128xf32>
    %14 = arith.mulf %12, %13 : vector<16x128xf32>
    %15 = arith.addf %9, %14 : vector<16x128xf32>
    %16 = vector.extract_strided_slice %0 {offsets = [0, 2], sizes = [16, 1], strides = [1, 1]} : vector<16x4xf32> to vector<16x1xf32>
    %c2 = arith.constant 2 : index
    %c0_6 = arith.constant 0 : index
    %17 = vector.load %arg2[%c2, %c0_6] : memref<4x128xf32, #tpu.memory_space<vmem>>, vector<1x128xf32>
    %18 = vector.broadcast %16 : vector<16x1xf32> to vector<16x128xf32>
    %19 = vector.broadcast %17 : vector<1x128xf32> to vector<16x128xf32>
    %20 = arith.mulf %18, %19 : vector<16x128xf32>
    %21 = arith.addf %15, %20 : vector<16x128xf32>
    %22 = vector.extract_strided_slice %0 {offsets = [0, 3], sizes = [16, 1], strides = [1, 1]} : vector<16x4xf32> to vector<16x1xf32>
    %c3 = arith.constant 3 : index
    %c0_7 = arith.constant 0 : index
    %23 = vector.load %arg2[%c3, %c0_7] : memref<4x128xf32, #tpu.memory_space<vmem>>, vector<1x128xf32>
    %24 = vector.broadcast %22 : vector<16x1xf32> to vector<16x128xf32>
    %25 = vector.broadcast %23 : vector<1x128xf32> to vector<16x128xf32>
    %26 = arith.mulf %24, %25 : vector<16x128xf32>
    %27 = arith.addf %21, %26 : vector<16x128xf32>
    %cst = arith.constant 0.000000e+00 : f32
    %28 = vector.broadcast %cst : f32 to vector<16x128xf32>
    %29 = arith.maximumf %27, %28 : vector<16x128xf32>
    %30 = arith.truncf %29 : vector<16x128xf32> to vector<16x128xbf16>
    %c0_8 = arith.constant 0 : index
    %c0_9 = arith.constant 0 : index
    %31 = vector.load %arg4[%c0_8, %c0_9] : memref<128x2xbf16, #tpu.memory_space<vmem>>, vector<128x2xbf16>
    %cst_10 = arith.constant dense<0.000000e+00> : vector<16x2xf32>
    %32 = tpu.matmul %30, %31, %cst_10 {dimension_numbers = #tpu.dot_dimension_numbers<[1], [0], [0], [1], [0, 0, 1, 1], [], []>} : vector<16x128xbf16>, vector<128x2xbf16>, vector<16x2xf32> -> vector<16x2xf32>
    %c0_11 = arith.constant 0 : index
    %c0_12 = arith.constant 0 : index
    %33 = vector.load %arg5[%c0_11, %c0_12] : memref<1x2xf32, #tpu.memory_space<vmem>>, vector<1x2xf32>
    %34 = vector.broadcast %33 : vector<1x2xf32> to vector<16x2xf32>
    %35 = arith.addf %32, %34 : vector<16x2xf32>
    %c0_13 = arith.constant 0 : index
    %c0_14 = arith.constant 0 : index
    %36 = vector.load %arg6[%c0_13, %c0_14] : memref<16x2xf32, #tpu.memory_space<vmem>>, vector<16x2xf32>
    tpu.vector_store %arg6[%c0_13, %c0_14], %35 {strides = array<i32>} : memref<16x2xf32, #tpu.memory_space<vmem>>, vector<16x2xf32>,
    return
  }
  func.func @transform_0(%arg0: i32) -> (i32, i32) {
    %c0_i32 = arith.constant 0 : i32
    %c0_i32_0 = arith.constant 0 : i32
    return %arg0, %c0_i32 : i32, i32
  }
  func.func @transform_1(%arg0: i32) -> (i32, i32) {
    %c0_i32 = arith.constant 0 : i32
    %c0_i32_0 = arith.constant 0 : i32
    %c0_i32_1 = arith.constant 0 : i32
    return %c0_i32, %c0_i32_0 : i32, i32
  }
  func.func @transform_2(%arg0: i32) -> (i32, i32) {
    %c0_i32 = arith.constant 0 : i32
    %c0_i32_0 = arith.constant 0 : i32
    %c0_i32_1 = arith.constant 0 : i32
    return %c0_i32, %c0_i32_0 : i32, i32
  }
  func.func @transform_3(%arg0: i32) -> (i32, i32) {
    %c0_i32 = arith.constant 0 : i32
    %c0_i32_0 = arith.constant 0 : i32
    %c0_i32_1 = arith.constant 0 : i32
    return %c0_i32, %c0_i32_0 : i32, i32
  }
  func.func @transform_4(%arg0: i32) -> (i32, i32) {
    %c0_i32 = arith.constant 0 : i32
    %c0_i32_0 = arith.constant 0 : i32
    %c0_i32_1 = arith.constant 0 : i32
    return %c0_i32, %c0_i32_0 : i32, i32
  }
  func.func @transform_5(%arg0: i32) -> (i32, i32) {
    %c0_i32 = arith.constant 0 : i32
    %c0_i32_0 = arith.constant 0 : i32
    return %arg0, %c0_i32 : i32, i32
  }
}

</mosaic_0001>

<llo_original>
// kernel: tpu_custom_call.1
$region0: #{tpu_custom_call.1}
  #allocation0 [shape = 'u32[]', space=smem, size = 0x4, offset = 0x4, fixed_abs, tag = 'smem constant byte address 0x4 - core index']
  #allocation1 [shape = 'u32[144,128]{1,0:T(1,128)}', space=vmem, size = 0x12000, scoped, tag = 'internal scratch']
  %s0 = inlined_call_operand.vmem [shape: f32[10,4], index: 0, kind: input, shape index: {}]
  %s1 = inlined_call_operand.vmem [shape: f32[4,128], index: 1, kind: input, shape index: {}]
  %s2 = inlined_call_operand.vmem [shape: f32[1,128], index: 2, kind: input, shape index: {}]
  %s3 = inlined_call_operand.vmem [shape: bf16[128,2], index: 3, kind: input, shape index: {}]
  %s4 = inlined_call_operand.vmem [shape: f32[1,2], index: 4, kind: input, shape index: {}]
  %s5 = inlined_call_operand.vmem [shape: f32[10,2], index: 5, kind: output, shape index: {}]
  %s6 = sld [smem:[#allocation0]]
  $region30: #{tpu_custom_call.1} parent=0
    _
  %s8 = ssub.s32 1, %s6
  %s9 = scalar_select 0, %s8, %s6
  // Predicated region
  $region2: #{tpu_custom_call.1} parent=0 // pred_check
    _
  $region3: #{tpu_custom_call.1} parent=0 // pred_check_branch
    %11 = sbr.rel (0) target = $region5
  $region4: #{tpu_custom_call.1} parent=0 // pred_region
    _
  $region5: #{tpu_custom_call.1} parent=0 // pred_fallthru
    _
  // Predicated region
  $region6: #{tpu_custom_call.1} parent=0 // pred_check
    _
  $region7: #{tpu_custom_call.1} parent=0 // pred_check_branch
    %13 = sbr.rel (0) target = $region9
  $region8: #{tpu_custom_call.1} parent=0 // pred_region
    _
  $region9: #{tpu_custom_call.1} parent=0 // pred_fallthru
    _
  // Predicated region
  $region10: #{tpu_custom_call.1} parent=0 // pred_check
    _
  $region11: #{tpu_custom_call.1} parent=0 // pred_check_branch
    %15 = sbr.rel (0) target = $region13
  $region12: #{tpu_custom_call.1} parent=0 // pred_region
    _
  $region13: #{tpu_custom_call.1} parent=0 // pred_fallthru
    _
  // Predicated region
  $region14: #{tpu_custom_call.1} parent=0 // pred_check
    _
  $region15: #{tpu_custom_call.1} parent=0 // pred_check_branch
    %17 = sbr.rel (0) target = $region17
  $region16: #{tpu_custom_call.1} parent=0 // pred_region
    _
  $region17: #{tpu_custom_call.1} parent=0 // pred_fallthru
    _
  // Predicated region
  $region18: #{tpu_custom_call.1} parent=0 // pred_check
    _
  $region19: #{tpu_custom_call.1} parent=0 // pred_check_branch
    %19 = sbr.rel (0) target = $region21
  $region20: #{tpu_custom_call.1} parent=0 // pred_region
    _
  $region21: #{tpu_custom_call.1} parent=0 // pred_fallthru
    _
  %v21 = vld [vmem:[%s0] sm:$0xff]
  %v22 = vld [vmem:[%s0 + $0x8] sm:$0xff]
  %v23 = vld [vmem:[%s2] sm:$0x1]
  %v25 = vlaneseq
  %v26 = vshrl.u32 %v25, 7
  %v27 = vsub.s32 0, %v26
  %v28 = vrot.slane %v23, %v27
  %v30 = vld [vmem:[%s1] sm:$0x1]
  %32 = vset.pattern.permute.xlu0 0
  %33 = vperm.xlu0 %32, %v21
  %v34 = vpop.permute.xlu0 %33
  %37 = vset.pattern.permute.xlu0 0
  %38 = vperm.xlu0 %37, %v22
  %v39 = vpop.permute.xlu0 %38
  %v41 = vlaneseq
  %v42 = vshrl.u32 %v41, 7
  %v43 = vsub.s32 0, %v42
  %v44 = vrot.slane %v30, %v43
  %v45 = vmul.f32 %v34, %v44
  %v46 = vmul.f32 %v39, %v44
  %v47 = vadd.f32 %v28, %v45
  %v48 = vadd.f32 %v28, %v46
  %v49 = vld [vmem:[%s1 + $0x1] sm:$0x1]
  %50 = vset.pattern.permute.xlu0 1
  %51 = vperm.xlu0 %50, %v21
  %v52 = vpop.permute.xlu0 %51
  %54 = vset.pattern.permute.xlu0 1
  %55 = vperm.xlu0 %54, %v22
  %v56 = vpop.permute.xlu0 %55
  %v58 = vlaneseq
  %v59 = vshrl.u32 %v58, 7
  %v60 = vsub.s32 0, %v59
  %v61 = vrot.slane %v49, %v60
  %v62 = vmul.f32 %v52, %v61
  %v63 = vmul.f32 %v56, %v61
  %v64 = vadd.f32 %v47, %v62
  %v65 = vadd.f32 %v48, %v63
  %v66 = vld [vmem:[%s1 + $0x2] sm:$0x1]
  %67 = vset.pattern.permute.xlu0 2
  %68 = vperm.xlu0 %67, %v21
  %v69 = vpop.permute.xlu0 %68
  %71 = vset.pattern.permute.xlu0 2
  %72 = vperm.xlu0 %71, %v22
  %v73 = vpop.permute.xlu0 %72
  %v75 = vlaneseq
  %v76 = vshrl.u32 %v75, 7
  %v77 = vsub.s32 0, %v76
  %v78 = vrot.slane %v66, %v77
  %v79 = vmul.f32 %v69, %v78
  %v80 = vmul.f32 %v73, %v78
  %v81 = vadd.f32 %v64, %v79
  %v82 = vadd.f32 %v65, %v80
  %v83 = vld [vmem:[%s1 + $0x3] sm:$0x1]
  %84 = vset.pattern.permute.xlu0 3
  %85 = vperm.xlu0 %84, %v21
  %v86 = vpop.permute.xlu0 %85
  %88 = vset.pattern.permute.xlu0 3
  %89 = vperm.xlu0 %88, %v22
  %v90 = vpop.permute.xlu0 %89
  %v92 = vlaneseq
  %v93 = vshrl.u32 %v92, 7
  %v94 = vsub.s32 0, %v93
  %v95 = vrot.slane %v83, %v94
  %v96 = vmul.f32 %v86, %v95
  %v97 = vmul.f32 %v90, %v95
  %v98 = vadd.f32 %v81, %v96
  %v99 = vadd.f32 %v82, %v97
  %v100 = vmax.f32 %v98, 0.0
  %v101 = vmax.f32 %v99, 0.0
  %v102 = vpack.c.bf16 %v101, %v100
  %v103 = vld [vmem:[%s3] sm:$0xf]
  %v104 = vld [vmem:[%s3 + $0x4] sm:$0xf]
  %v105 = vld [vmem:[%s3 + $0x8] sm:$0xf]
  %v106 = vld [vmem:[%s3 + $0xc] sm:$0xf]
  %v107 = vld [vmem:[%s3 + $0x10] sm:$0xf]
  %v108 = vld [vmem:[%s3 + $0x14] sm:$0xf]
  %v109 = vld [vmem:[%s3 + $0x18] sm:$0xf]
  %v110 = vld [vmem:[%s3 + $0x1c] sm:$0xf]
  %v111 = vld [vmem:[%s3 + $0x20] sm:$0xf]
  %v112 = vld [vmem:[%s3 + $0x24] sm:$0xf]
  %v113 = vld [vmem:[%s3 + $0x28] sm:$0xf]
  %v114 = vld [vmem:[%s3 + $0x2c] sm:$0xf]
  %v115 = vld [vmem:[%s3 + $0x30] sm:$0xf]
  %v116 = vld [vmem:[%s3 + $0x34] sm:$0xf]
  %v117 = vld [vmem:[%s3 + $0x38] sm:$0xf]
  %v118 = vld [vmem:[%s3 + $0x3c] sm:$0xf]
  %v119 = vld [vmem:[%s4] sm:$0x1]
  %v121 = vlaneseq
  %v122 = vshrl.u32 %v121, 7
  %v123 = vsub.s32 0, %v122
  %v124 = vrot.slane %v119, %v123
  %v142 = vunpack.c.l.b16 %v103
  %v143 = vunpack.c.l.b16 %v104
  %v144 = vunpack.c.l.b16 %v105
  %v145 = vunpack.c.l.b16 %v106
  %v146 = vunpack.c.l.b16 %v107
  %v147 = vunpack.c.l.b16 %v108
  %v148 = vunpack.c.l.b16 %v109
  %v149 = vunpack.c.l.b16 %v110
  %v150 = vunpack.c.l.b16 %v111
  %v151 = vunpack.c.l.b16 %v112
  %v152 = vunpack.c.l.b16 %v113
  %v153 = vunpack.c.l.b16 %v114
  %v154 = vunpack.c.l.b16 %v115
  %v155 = vunpack.c.l.b16 %v116
  %v156 = vunpack.c.l.b16 %v117
  %v157 = vunpack.c.l.b16 %v118
  %v158 = vpack.c.b16 %v143, %v142
  %v159 = vpack.c.b16 %v145, %v144
  %v160 = vpack.c.b16 %v147, %v146
  %v161 = vpack.c.b16 %v149, %v148
  %v162 = vpack.c.b16 %v151, %v150
  %v163 = vpack.c.b16 %v153, %v152
  %v164 = vpack.c.b16 %v155, %v154
  %v165 = vpack.c.b16 %v157, %v156
  %174 = vmatprep.subr.bf16.mxu0 0
  %175 = vmatpush1.bf16.msra.mxu0 %v165
  %176 = vmatprep.subr.bf16.mxu0 0
  %177 = vmatpush1.bf16.msra.mxu0 %v164
  %178 = vmatprep.subr.bf16.mxu0 0
  %179 = vmatpush1.bf16.msra.mxu0 %v163
  %180 = vmatprep.subr.bf16.mxu0 0
  %181 = vmatpush1.bf16.msra.mxu0 %v162
  %182 = vmatprep.subr.bf16.mxu0 0
  %183 = vmatpush1.bf16.msra.mxu0 %v161
  %184 = vmatprep.subr.bf16.mxu0 0
  %185 = vmatpush1.bf16.msra.mxu0 %v160
  %186 = vmatprep.subr.bf16.mxu0 0
  %187 = vmatpush1.bf16.msra.mxu0 %v159
  %188 = vmatprep.subr.bf16.mxu0 0
  %189 = vmatpush1.bf16.msra.mxu0 %v158
  %190 = vmatprep.subr.bf16.mxu0 0
  %191 = vmatpush2.bf16.msra.mxu0 0
  %192 = vmatprep.subr.bf16.mxu0 0
  %193 = vmatpush2.bf16.msra.mxu0 0
  %194 = vmatprep.subr.bf16.mxu0 0
  %195 = vmatpush2.bf16.msra.mxu0 0
  %196 = vmatprep.subr.bf16.mxu0 0
  %197 = vmatpush2.bf16.msra.mxu0 0
  %198 = vmatprep.subr.bf16.mxu0 0
  %199 = vmatpush2.bf16.msra.mxu0 0
  %200 = vmatprep.subr.bf16.mxu0 0
  %201 = vmatpush2.bf16.msra.mxu0 0
  %202 = vmatprep.subr.bf16.mxu0 0
  %203 = vmatpush2.bf16.msra.mxu0 0
  %204 = vmatprep.subr.bf16.mxu0 0
  %205 = vmatpush2.bf16.msra.mxu0 0
  %206 = vmatprep.mubr.bf16.mxu0 0
  %207 = vmatmul.mubr.bf16.gmra.mxu0 %v102
  %v208 = vpop.f32.mrf.mxu0
  %v209 = vadd.f32 %v124, %v208
  %v210 = vpop.f32.mrf.mxu0
  %v211 = vpop.f32.mrf.mxu0
  %v212 = vadd.f32 %v124, %v211
  %v213 = vpop.f32.mrf.mxu0
  %214 = vdwg.mxu0
  %vm215 = vcmask 15360
  %216 = vst.msk [vmem:[%s5] sm:$0xff] %vm215, %v209
  %217 = vst.msk [vmem:[%s5 + $0x8] sm:$0xff] %vm215, %v212
  // Predicated region
  $region22: #{tpu_custom_call.1} parent=0 // pred_check
    _
  $region23: #{tpu_custom_call.1} parent=0 // pred_check_branch
    %219 = sbr.rel (0) target = $region25
  $region24: #{tpu_custom_call.1} parent=0 // pred_region
    _
  $region25: #{tpu_custom_call.1} parent=0 // pred_fallthru
    _
  // Predicated region
  $region26: #{tpu_custom_call.1} parent=0 // pred_check
    _
  $region27: #{tpu_custom_call.1} parent=0 // pred_check_branch
    %221 = sbr.rel (0) target = $region29
  $region28: #{tpu_custom_call.1} parent=0 // pred_region
    _
  $region29: #{tpu_custom_call.1} parent=0 // pred_fallthru
    _

</llo_original>
